<compile_context>
chip_gen: v7x
topology: tpu7x:2x2x1
jax: 0.10.0
libtpu: 0.0.40
codegen_flags: <defaults>
</compile_context>

<pallas_src>
import functools
import math

import jax
import jax.numpy as jnp
from jax.experimental import pallas as pl
from jax.experimental.pallas import tpu as pltpu


# ----------------------------------------------------------------------------
# Pallas matmul kernels: single full-K block, fused epilogues, no scratch.
# ----------------------------------------------------------------------------
def _mm_plain_kernel(a_ref, b_ref, o_ref):
    o_ref[...] = jnp.dot(a_ref[...], b_ref[...],
                         preferred_element_type=jnp.float32)


def _mm_bias_kernel(a_ref, b_ref, bias_ref, o_ref, *, apply_relu):
    r = jnp.dot(a_ref[...], b_ref[...],
                preferred_element_type=jnp.float32) + bias_ref[...]
    if apply_relu:
        r = jnp.maximum(r, 0.0)
    o_ref[...] = r


def _mm_fista_kernel(a_ref, b_ref, bias_ref, g_ref, o_ref):
    # FISTA proximal epilogue: relu(g - (A@B) + bias)
    acc = jnp.dot(a_ref[...], b_ref[...], preferred_element_type=jnp.float32)
    o_ref[...] = jnp.maximum(g_ref[...] - acc + bias_ref[...], 0.0)


def _mm_fista_res_kernel(a_ref, b_ref, bias_ref, g_ref, o_ref, r_ref):
    # Same, but also emits the next residual  r = g - relu(...).
    acc = jnp.dot(a_ref[...], b_ref[...], preferred_element_type=jnp.float32)
    g = g_ref[...]
    gn = jnp.maximum(g - acc + bias_ref[...], 0.0)
    o_ref[...] = gn
    r_ref[...] = g - gn


def _pool4(z, groups):
    # 2x2 max-pool of groups of 4 consecutive rows.  Only static row slices +
    # elementwise maxima + a concatenate (robust Mosaic lowering; no strided
    # slices, no cross-sublane reductions).
    rows = []
    for i in range(groups):
        m = jnp.maximum(
            jnp.maximum(z[4 * i:4 * i + 1, :], z[4 * i + 1:4 * i + 2, :]),
            jnp.maximum(z[4 * i + 2:4 * i + 3, :], z[4 * i + 3:4 * i + 4, :]))
        rows.append(m)
    return jnp.concatenate(rows, axis=0)


def _mm_pool_kernel(a_ref, b_ref, bias_ref, o_ref, *, groups):
    # relu(A@B + bias) with a fused 2x2 max-pool over row groups of 4.
    z = jnp.dot(a_ref[...], b_ref[...],
                preferred_element_type=jnp.float32) + bias_ref[...]
    z = jnp.maximum(z, 0.0)
    o_ref[...] = _pool4(z, groups)


def _tail_kernel(p_ref, w6_ref, b6_ref, wc_ref, bc_ref, o_ref, *, batch):
    # conv6 (as matmul) + ReLU + 2x2 max-pool + Linear + log_softmax, fused.
    z = jnp.dot(p_ref[...], w6_ref[...],
                preferred_element_type=jnp.float32) + b6_ref[...]
    z = jnp.maximum(z, 0.0)                              # (4*batch, 512)
    feat = _pool4(z, batch)                              # (batch,   512)
    logits = jnp.dot(feat, wc_ref[...],
                     preferred_element_type=jnp.float32) + bc_ref[...]
    m = jnp.max(logits, axis=-1, keepdims=True)
    lse = jnp.log(jnp.sum(jnp.exp(logits - m), axis=-1, keepdims=True)) + m
    o_ref[...] = logits - lse


def _tile_n(N):
    # Full-N single block for the narrow layers (no padding, no extra grid
    # steps); 256-wide lane-dense blocks for the wide (>=512) layers so the
    # "parallel" N axis has >=2 blocks to pipeline / shard across cores.
    return 256 if (N >= 512 and N % 256 == 0) else N


def _pallas_matmul(a, b, bias2d=None, g=None, apply_relu=False,
                   with_residual=False):
    """out = epilogue(a @ b), K in a single block (no k axis, no scratch).

       bias2d None         -> a @ b
       bias2d only         -> (a @ b) + bias  (+ ReLU if apply_relu)
       g given             -> relu(g - (a @ b) + bias)          [FISTA prox]
       g + with_residual   -> also returns  g - relu(...)       [next resid]
    """
    M, K = a.shape
    K2, N = b.shape
    assert K == K2 and M % 8 == 0 and K % 8 == 0, (M, K, N)
    tn = _tile_n(N)

    in_specs = [pl.BlockSpec((M, K), lambda j: (0, 0)),
                pl.BlockSpec((K, tn), lambda j: (0, j))]
    operands = [a, b]
    if bias2d is not None:
        in_specs.append(pl.BlockSpec((1, tn), lambda j: (0, j)))
        operands.append(bias2d)

    out_spec = pl.BlockSpec((M, tn), lambda j: (0, j))
    out_shape = jax.ShapeDtypeStruct((M, N), jnp.float32)
    out_specs = out_spec

    if g is not None:
        in_specs.append(pl.BlockSpec((M, tn), lambda j: (0, j)))
        operands.append(g.astype(jnp.float32))
        if with_residual:
            kernel = _mm_fista_res_kernel
            out_shape = (out_shape, jax.ShapeDtypeStruct((M, N), jnp.float32))
            out_specs = (out_spec, out_spec)
        else:
            kernel = _mm_fista_kernel
    elif bias2d is not None:
        kernel = functools.partial(_mm_bias_kernel, apply_relu=apply_relu)
    else:
        kernel = _mm_plain_kernel

    return pl.pallas_call(
        kernel,
        out_shape=out_shape,
        grid=(N // tn,),
        in_specs=in_specs,
        out_specs=out_specs,
        compiler_params=pltpu.CompilerParams(
            dimension_semantics=("parallel",)),
    )(*operands)


def _pallas_matmul_pool(a, b, bias2d, groups):
    """relu(a@b + bias) followed by a fused 2x2 max-pool over row groups of 4."""
    M, K = a.shape
    _, N = b.shape
    assert M == 4 * groups and M % 8 == 0 and K % 8 == 0
    tn = _tile_n(N)
    return pl.pallas_call(
        functools.partial(_mm_pool_kernel, groups=groups),
        out_shape=jax.ShapeDtypeStruct((groups, N), jnp.float32),
        grid=(N // tn,),
        in_specs=[pl.BlockSpec((M, K), lambda j: (0, 0)),
                  pl.BlockSpec((K, tn), lambda j: (0, j)),
                  pl.BlockSpec((1, tn), lambda j: (0, j))],
        out_specs=pl.BlockSpec((groups, tn), lambda j: (0, j)),
        compiler_params=pltpu.CompilerParams(
            dimension_semantics=("parallel",)),
    )(a, b, bias2d)


# ----------------------------------------------------------------------------
# Conv / transposed-conv / tail wrappers built on the Pallas matmuls
# ----------------------------------------------------------------------------
def _im2col(x, kh, kw, stride, pad):
    N, H, W, C = x.shape
    xp = jnp.pad(x, ((0, 0), (pad, pad), (pad, pad), (0, 0)))
    Ho = (H + 2 * pad - kh) // stride + 1
    Wo = (W + 2 * pad - kw) // stride + 1
    cols = []
    for i in range(kh):
        for j in range(kw):
            cols.append(xp[:, i:i + stride * Ho:stride,
                           j:j + stride * Wo:stride, :])
    patches = jnp.stack(cols, axis=3).reshape(N * Ho * Wo, kh * kw * C)
    return patches, Ho, Wo


def conv2d(x, wf, bias2d, kh, kw, stride, pad, relu=False):
    """x: NHWC; wf: pre-flattened (kh*kw*Cin, O) weight; bias2d: (1, O) f32."""
    patches, Ho, Wo = _im2col(x.astype(wf.dtype), kh, kw, stride, pad)
    out = _pallas_matmul(patches, wf, bias2d, apply_relu=relu)
    return out.reshape(x.shape[0], Ho, Wo, wf.shape[1])


def conv2d_fista(r, wf, bias2d, g, kh, kw, stride, pad, with_residual=False):
    """relu(g - conv(r, wf) + bias)  (and optionally  g - that), fused into the
    conv matmul epilogue.  r: NHWC residual; g: NHWC conv-output-shaped."""
    patches, _, _ = _im2col(r.astype(wf.dtype), kh, kw, stride, pad)
    O = wf.shape[1]
    res = _pallas_matmul(patches, wf, bias2d, g=g.reshape(-1, O),
                         with_residual=with_residual)
    if with_residual:
        gn, rn = res
        return gn.reshape(g.shape), rn.reshape(g.shape)
    return res.reshape(g.shape)


def _col2im_s2k4p1(Z):
    """Scatter-add of per-pixel tap contributions for conv_transpose
    (stride=2, kernel=4, padding=1).  Z: (N, H, W, 4, 4, C) -> (N, 2H, 2W, C).
    out[2a+py, 2b+px] = sum of the 2x2 (input, tap) pairs of that parity."""
    N, H, W, _, _, C = Z.shape
    Zp = jnp.pad(Z, ((0, 0), (1, 1), (1, 1), (0, 0), (0, 0), (0, 0)))

    def s(dy, dx, ky, kx):
        return Zp[:, dy:dy + H, dx:dx + W, ky, kx, :]

    ee = s(0, 0, 3, 3) + s(0, 1, 3, 1) + s(1, 0, 1, 3) + s(1, 1, 1, 1)
    eo = s(0, 1, 3, 2) + s(0, 2, 3, 0) + s(1, 1, 1, 2) + s(1, 2, 1, 0)
    oe = s(1, 0, 2, 3) + s(1, 1, 2, 1) + s(2, 0, 0, 3) + s(2, 1, 0, 1)
    oo = s(1, 1, 2, 2) + s(1, 2, 2, 0) + s(2, 1, 0, 2) + s(2, 2, 0, 0)

    row0 = jnp.stack([ee, eo], axis=3)          # (N,H,W,2,C)  px axis
    row1 = jnp.stack([oe, oo], axis=3)
    out6 = jnp.stack([row0, row1], axis=2)      # (N,H,2,W,2,C) py,px
    return out6.reshape(N, 2 * H, 2 * W, C)


def conv_transpose_s2k4p1(x, wtf, cout):
    """conv_transpose2d(x, W, stride=2, padding=1) for 4x4 kernels.
    x: NHWC (N,H,W,Cin); wtf: pre-flattened (Cin, 16*Cout) weight.
    Zero-free matmul (K = Cin) + cheap col2im shifted adds (XLA glue)."""
    N, H, W, C = x.shape
    zflat = _pallas_matmul(x.reshape(N * H * W, C).astype(wtf.dtype), wtf)
    Z = zflat.reshape(N, H, W, 4, 4, cout)
    return _col2im_s2k4p1(Z)


def conv2d_pool2x2(x, wf, bias2d):
    """maxpool2x2(relu(conv3x3/s1/p1(x) + b)) with the pool fused into the
    matmul epilogue (im2col rows pre-ordered so each pool window is 4 rows)."""
    n, H, W, _ = x.shape
    patches, Ho, Wo = _im2col(x.astype(wf.dtype), 3, 3, 1, 1)
    K = patches.shape[1]
    p = patches.reshape(n, Ho // 2, 2, Wo // 2, 2, K)
    p = jnp.transpose(p, (0, 1, 3, 2, 4, 5)).reshape(n * Ho * Wo, K)
    groups = n * (Ho // 2) * (Wo // 2)
    out = _pallas_matmul_pool(p, wf, bias2d, groups)
    return out.reshape(n, Ho // 2, Wo // 2, wf.shape[1])


def conv6_pool_classifier(g5, w6f, b6_2d, wc, bc_2d):
    """Fused tail: conv6 + ReLU + 2x2 max-pool + Linear + log_softmax."""
    n = g5.shape[0]
    patches, _, _ = _im2col(g5.astype(w6f.dtype), 3, 3, 1, 1)   # (4n, 9*512)
    M, K = patches.shape
    Kw, N = w6f.shape
    C = wc.shape[1]
    return pl.pallas_call(
        functools.partial(_tail_kernel, batch=n),
        out_shape=jax.ShapeDtypeStruct((n, C), jnp.float32),
        grid=(1,),
        in_specs=[pl.BlockSpec((M, K), lambda i: (0, 0)),
                  pl.BlockSpec((Kw, N), lambda i: (0, 0)),
                  pl.BlockSpec((1, N), lambda i: (0, 0)),
                  pl.BlockSpec((N, C), lambda i: (0, 0)),
                  pl.BlockSpec((1, C), lambda i: (0, 0))],
        out_specs=pl.BlockSpec((n, C), lambda i: (0, 0)),
        compiler_params=pltpu.CompilerParams(
            dimension_semantics=("arbitrary",)),
    )(patches, w6f, b6_2d, wc, bc_2d)


# ----------------------------------------------------------------------------
# Model: parameters + forward (matches ML_FISTA semantics)
# ----------------------------------------------------------------------------
def init_params(key):
    ks = jax.random.split(key, 12)

    def rnd(k, shape, scale):
        return scale * jax.random.normal(k, shape, jnp.float32)

    p = {}
    p["W1"] = rnd(ks[0], (32, 3, 4, 4), 0.1 / math.sqrt(3 * 16))
    p["W2"] = rnd(ks[1], (64, 32, 4, 4), 0.1 / math.sqrt(32 * 16))
    p["W3"] = rnd(ks[2], (128, 64, 4, 4), 0.1 / math.sqrt(64 * 16))
    p["W4"] = rnd(ks[3], (256, 128, 3, 3), 1.0 / math.sqrt(128 * 9))
    p["W5"] = rnd(ks[4], (512, 256, 3, 3), 1.0 / math.sqrt(256 * 9))
    p["W6"] = rnd(ks[5], (512, 512, 3, 3), 1.0 / math.sqrt(512 * 9))
    p["c1"] = jnp.ones((1, 1, 1, 1), jnp.float32)
    p["c2"] = jnp.ones((1, 1, 1, 1), jnp.float32)
    p["c3"] = jnp.ones((1, 1, 1, 1), jnp.float32)
    p["b1"] = jnp.zeros((32,), jnp.float32)
    p["b2"] = jnp.zeros((64,), jnp.float32)
    p["b3"] = jnp.zeros((128,), jnp.float32)
    p["b4"] = jnp.zeros((256,), jnp.float32)
    p["b5"] = jnp.zeros((512,), jnp.float32)
    p["b6"] = jnp.zeros((512,), jnp.float32)
    bound = 1.0 / math.sqrt(512)
    p["Wclass"] = jax.random.uniform(ks[9], (512, 10), jnp.float32,
                                     minval=-bound, maxval=bound)
    p["bclass"] = jax.random.uniform(ks[10], (10,), jnp.float32,
                                     minval=-bound, maxval=bound)
    return p


def _prep_weights(params):
    """Flatten/scale/cast every conv weight and reshape every bias exactly
    once per forward call (all of it hoisted out of the FISTA T-loop)."""
    def conv_flat(w, scale=None):
        O, C, kh, kw = w.shape
        wf = jnp.transpose(w, (2, 3, 1, 0)).reshape(kh * kw * C, O)
        if scale is not None:
            wf = wf * scale
        return wf.astype(jnp.bfloat16)

    def convT_flat(w):
        Cin, Cout, kh, kw = w.shape
        return jnp.transpose(w, (0, 2, 3, 1)).reshape(
            Cin, kh * kw * Cout).astype(jnp.bfloat16)

    def bias2d(b):
        return b.reshape(1, -1).astype(jnp.float32)

    c1 = params["c1"].reshape(())
    c2 = params["c2"].reshape(())
    c3 = params["c3"].reshape(())
    return {
        # c_i folded into the forward-conv weights (c*conv(x,W)=conv(x,c*W))
        "W1c": conv_flat(params["W1"], c1),
        "W2c": conv_flat(params["W2"], c2),
        "W3c": conv_flat(params["W3"], c3),
        "W1t": convT_flat(params["W1"]),
        "W2t": convT_flat(params["W2"]),
        "W3t": convT_flat(params["W3"]),
        "W4f": conv_flat(params["W4"]),
        "W5f": conv_flat(params["W5"]),
        "W6f": conv_flat(params["W6"]),
        "b1": bias2d(params["b1"]), "b2": bias2d(params["b2"]),
        "b3": bias2d(params["b3"]), "b4": bias2d(params["b4"]),
        "b5": bias2d(params["b5"]), "b6": bias2d(params["b6"]),
        "Wc": params["Wclass"].astype(jnp.float32),
        "bc": bias2d(params["bclass"]),
    }


def forward(params, x_nchw, *, T):
    # PyTorch feeds NCHW; kernels use NHWC (channels on the 128-lane axis).
    x = jnp.transpose(x_nchw, (0, 2, 3, 1)).astype(jnp.float32)
    w = _prep_weights(params)

    # Encoder: gamma_i = relu(c_i*conv(prev, W_i, s=2, p=1) + b_i)
    g1 = conv2d(x,  w["W1c"], w["b1"], 4, 4, 2, 1, relu=True)   # (N,16,16, 32)
    g2 = conv2d(g1, w["W2c"], w["b2"], 4, 4, 2, 1, relu=True)   # (N, 8, 8, 64)
    g3 = conv2d(g2, w["W3c"], w["b3"], 4, 4, 2, 1, relu=True)   # (N, 4, 4,128)

    g3_prv = g3
    t = 1.0
    for _ in range(T):
        t_prv = t
        t = (1.0 + math.sqrt(1.0 + 4.0 * t_prv * t_prv)) / 2.0
        mom = (t_prv - 1.0) / t
        Z = g3 + mom * (g3 - g3_prv)                            # FISTA momentum
        g3_prv = g3

        g2_t = conv_transpose_s2k4p1(Z,    w["W3t"], 64)        # (N, 8, 8, 64)
        g1_t = conv_transpose_s2k4p1(g2_t, w["W2t"], 32)        # (N,16,16, 32)
        r1 = conv_transpose_s2k4p1(g1_t, w["W1t"], 3) - x       # (N,32,32,  3)

        # gamma1 = relu(g1_t - c1*conv(r1, W1) + b1);  r2 = g1_t - gamma1
        g1, r2 = conv2d_fista(r1, w["W1c"], w["b1"], g1_t, 4, 4, 2, 1,
                              with_residual=True)
        # gamma2 = relu(g2_t - c2*conv(r2, W2) + b2);  r3 = g2_t - gamma2
        #   (convT(g2_t, W2) == g1_t is reused, no recompute)
        g2, r3 = conv2d_fista(r2, w["W2c"], w["b2"], g2_t, 4, 4, 2, 1,
                              with_residual=True)
        # gamma3 = relu(Z - c3*conv(r3, W3) + b3)   (convT(Z, W3) == g2_t)
        g3 = conv2d_fista(r3, w["W3c"], w["b3"], Z, 4, 4, 2, 1)

    g4 = conv2d(g3, w["W4f"], w["b4"], 3, 3, 1, 1, relu=True)   # (N,4,4,256)
    g5 = conv2d_pool2x2(g4, w["W5f"], w["b5"])                  # (N,2,2,512)
    return conv6_pool_classifier(g5, w["W6f"], w["b6"], w["Wc"], w["bc"])


# ----------------------------------------------------------------------------
# Pure-JAX (lax) reference of the PyTorch module, for correctness checks.
# ----------------------------------------------------------------------------
def _conv_ref(x, w, stride, pad):
    return jax.lax.conv_general_dilated(
        x, w, window_strides=(stride, stride),
        padding=((pad, pad), (pad, pad)),
        dimension_numbers=("NCHW", "OIHW", "NCHW"))


def _convT_ref(x, w, stride, pad):
    k = w.shape[-1]
    wt = jnp.transpose(w[:, :, ::-1, ::-1], (1, 0, 2, 3))
    return jax.lax.conv_general_dilated(
        x, wt, window_strides=(1, 1),
        padding=((k - 1 - pad, k - 1 - pad),) * 2,
        lhs_dilation=(stride, stride),
        dimension_numbers=("NCHW", "OIHW", "NCHW"))


def _maxpool_ref(x):
    n, c, h, w_ = x.shape
    return jnp.max(x.reshape(n, c, h // 2, 2, w_ // 2, 2), axis=(3, 5))


def reference_forward(params, x, T):
    def b(v):
        return v.reshape(1, -1, 1, 1)

    c1, c2, c3 = params["c1"], params["c2"], params["c3"]
    g1 = jax.nn.relu(c1 * _conv_ref(x, params["W1"], 2, 1) + b(params["b1"]))
    g2 = jax.nn.relu(c2 * _conv_ref(g1, params["W2"], 2, 1) + b(params["b2"]))
    g3 = jax.nn.relu(c3 * _conv_ref(g2, params["W3"], 2, 1) + b(params["b3"]))
    g3_prv = g3
    t = 1.0
    for _ in range(T):
        t_prv = t
        t = (1.0 + math.sqrt(1.0 + 4.0 * t_prv * t_prv)) / 2.0
        Z = g3 + (t_prv - 1.0) / t * (g3 - g3_prv)
        g3_prv = g3
        g2 = _convT_ref(Z, params["W3"], 2, 1)
        g1 = _convT_ref(g2, params["W2"], 2, 1)
        g1 = jax.nn.relu(g1 - c1 * _conv_ref(
            _convT_ref(g1, params["W1"], 2, 1) - x, params["W1"], 2, 1)
            + b(params["b1"]))
        g2 = jax.nn.relu(g2 - c2 * _conv_ref(
            _convT_ref(g2, params["W2"], 2, 1) - g1, params["W2"], 2, 1)
            + b(params["b2"]))
        g3 = jax.nn.relu(Z - c3 * _conv_ref(
            _convT_ref(Z, params["W3"], 2, 1) - g2, params["W3"], 2, 1)
            + b(params["b3"]))
    g4 = jax.nn.relu(_conv_ref(g3, params["W4"], 1, 1) + b(params["b4"]))
    g5 = _maxpool_ref(jax.nn.relu(_conv_ref(g4, params["W5"], 1, 1)
                                  + b(params["b5"])))
    g6 = _maxpool_ref(jax.nn.relu(_conv_ref(g5, params["W6"], 1, 1)
                                  + b(params["b6"])))
    flat = g6.reshape(g6.shape[0], -1)
    logits = flat @ params["Wclass"] + params["bclass"]
    return jax.nn.log_softmax(logits, axis=-1)


if __name__ == "__main__":
    key = jax.random.PRNGKey(0)
    pkey, xkey, ukey = jax.random.split(key, 3)
    params = init_params(pkey)

    # CIFAR-shaped input (batch=2, 3x32x32, NCHW as in the PyTorch module).
    x = jax.random.normal(xkey, (2, 3, 32, 32), jnp.float32)
    T = 2

    def fwd_flat_w(wc):           # (O,C,kh,kw) -> (kh*kw*C, O)
        O, C, kh, kw = wc.shape
        return jnp.transpose(wc, (2, 3, 1, 0)).reshape(kh * kw * C, O)

    def t_flat_w(wc):             # (Cin,Cout,kh,kw) -> (Cin, kh*kw*Cout)
        Cin, Cout, kh, kw = wc.shape
        return jnp.transpose(wc, (0, 2, 3, 1)).reshape(Cin, kh * kw * Cout)

    k1, k2, k3, k4, k5, k6, k7 = jax.random.split(ukey, 7)
    nhwc = lambda a: jnp.transpose(a, (0, 2, 3, 1))
    nchw = lambda a: jnp.transpose(a, (0, 3, 1, 2))

    # --- unit check 1: transposed conv (f32) vs lax reference ---------------
    zt = jax.random.normal(k1, (2, 4, 4, 128), jnp.float32)
    wt = 0.05 * jax.random.normal(k2, (128, 64, 4, 4), jnp.float32)
    got = jax.jit(lambda z, wf: conv_transpose_s2k4p1(z, wf, 64))(zt, t_flat_w(wt))
    ref = nhwc(_convT_ref(nchw(zt), wt, 2, 1))
    assert bool(jnp.allclose(got, ref, rtol=5e-3, atol=1e-3)), \
        float(jnp.max(jnp.abs(got - ref)))

    # --- unit check 2: stride-2 conv (f32) vs lax reference -----------------
    xt = jax.random.normal(k3, (2, 16, 16, 32), jnp.float32)
    wcv = 0.05 * jax.random.normal(k4, (64, 32, 4, 4), jnp.float32)
    zb = jnp.zeros((1, 64), jnp.float32)
    got = jax.jit(lambda a, wf, b2: conv2d(a, wf, b2, 4, 4, 2, 1))(
        xt, fwd_flat_w(wcv), zb)
    ref = nhwc(_conv_ref(nchw(xt), wcv, 2, 1))
    assert bool(jnp.allclose(got, ref, rtol=5e-3, atol=1e-3)), \
        float(jnp.max(jnp.abs(got - ref)))

    # --- unit check 3: fused conv + ReLU + maxpool (f32) vs lax reference ---
    xp_ = jax.random.normal(k5, (2, 4, 4, 256), jnp.float32)
    wp = 0.02 * jax.random.normal(k6, (512, 256, 3, 3), jnp.float32)
    zb5 = jnp.zeros((1, 512), jnp.float32)
    got = jax.jit(conv2d_pool2x2)(xp_, fwd_flat_w(wp), zb5)
    ref = nhwc(_maxpool_ref(jax.nn.relu(_conv_ref(nchw(xp_), wp, 1, 1))))
    assert bool(jnp.allclose(got, ref, rtol=5e-3, atol=1e-3)), \
        float(jnp.max(jnp.abs(got - ref)))

    # --- unit check 4: fused tail (conv6+pool+linear+log_softmax, f32) ------
    g5t = jax.random.normal(k7, (2, 2, 2, 512), jnp.float32)
    w6t = 0.02 * jax.random.normal(k1, (512, 512, 3, 3), jnp.float32)
    wct = 0.1 * jax.random.normal(k2, (512, 10), jnp.float32)
    bct = 0.1 * jax.random.normal(k3, (1, 10), jnp.float32)
    got = jax.jit(conv6_pool_classifier)(g5t, fwd_flat_w(w6t), zb5, wct, bct)
    feat = _maxpool_ref(jax.nn.relu(_conv_ref(nchw(g5t), w6t, 1, 1)))
    ref = jax.nn.log_softmax(feat.reshape(2, -1) @ wct + bct.reshape(-1), axis=-1)
    assert bool(jnp.allclose(got, ref, rtol=5e-3, atol=1e-3)), \
        float(jnp.max(jnp.abs(got - ref)))

    # --- end-to-end forward vs pure-lax reference (bf16 tolerance) ----------
    fwd = jax.jit(functools.partial(forward, T=T))
    out = jax.block_until_ready(fwd(params, x))

    assert out.shape == (2, 10), out.shape
    assert bool(jnp.all(jnp.isfinite(out)))
    # rows of a log_softmax must exp-sum to 1
    assert bool(jnp.allclose(jnp.sum(jnp.exp(out), axis=1), 1.0, atol=1e-3))

    ref_out = jax.jit(functools.partial(reference_forward, T=T))(params, x)
    assert bool(jnp.allclose(out, ref_out, atol=5e-2)), \
        float(jnp.max(jnp.abs(out - ref_out)))

    print("KERNEL_OK")
</pallas_src>

<mosaic_0001>
module attributes {stable_mosaic.version = 11 : i64} {
  func.func @_mm_plain_kernel(%arg0: i32, %arg1: memref<32x128xf32, #tpu.memory_space<vmem>>, %arg2: memref<128x256xf32, #tpu.memory_space<vmem>>, %arg3: memref<32x256xf32, #tpu.memory_space<vmem>>) attributes {dimension_semantics = [#tpu.dimension_semantics<parallel>], iteration_bounds = array<i64: 4>, scalar_prefetch = 0 : i64, scratch_operands = 0 : i64, tpu.core_type = #tpu.core_type<tc>, window_params = [{pipeline_mode = #tpu.pipeline_mode<synchronous>, transform_indices = @transform_0, window_bounds = array<i64: 32, 128>}, {transform_indices = @transform_1, window_bounds = array<i64: 128, 256>}, {transform_indices = @transform_2, window_bounds = array<i64: 32, 256>}]} {
    %c0 = arith.constant 0 : index
    %c0_0 = arith.constant 0 : index
    %0 = vector.load %arg1[%c0, %c0_0] : memref<32x128xf32, #tpu.memory_space<vmem>>, vector<32x128xf32>
    %c0_1 = arith.constant 0 : index
    %c0_2 = arith.constant 0 : index
    %1 = vector.load %arg2[%c0_1, %c0_2] : memref<128x256xf32, #tpu.memory_space<vmem>>, vector<128x256xf32>
    %cst = arith.constant dense<0.000000e+00> : vector<32x256xf32>
    %2 = tpu.matmul %0, %1, %cst {dimension_numbers = #tpu.dot_dimension_numbers<[1], [0], [0], [1], [0, 0, 1, 1], [], []>} : vector<32x128xf32>, vector<128x256xf32>, vector<32x256xf32> -> vector<32x256xf32>
    %c0_3 = arith.constant 0 : index
    %c0_4 = arith.constant 0 : index
    %3 = vector.load %arg3[%c0_3, %c0_4] : memref<32x256xf32, #tpu.memory_space<vmem>>, vector<32x256xf32>
    tpu.vector_store %arg3[%c0_3, %c0_4], %2 {strides = array<i32>} : memref<32x256xf32, #tpu.memory_space<vmem>>, vector<32x256xf32>,
    return
  }
  func.func @transform_0(%arg0: i32) -> (i32, i32) {
    %c0_i32 = arith.constant 0 : i32
    %c0_i32_0 = arith.constant 0 : i32
    %c0_i32_1 = arith.constant 0 : i32
    return %c0_i32, %c0_i32_0 : i32, i32
  }
  func.func @transform_1(%arg0: i32) -> (i32, i32) {
    %c0_i32 = arith.constant 0 : i32
    %c0_i32_0 = arith.constant 0 : i32
    return %c0_i32, %arg0 : i32, i32
  }
  func.func @transform_2(%arg0: i32) -> (i32, i32) {
    %c0_i32 = arith.constant 0 : i32
    %c0_i32_0 = arith.constant 0 : i32
    return %c0_i32, %arg0 : i32, i32
  }
}

</mosaic_0001>

<llo_original>
// kernel: _lambda_.1
$region0: #{_lambda_.1}
  #allocation0 [shape = 'u32[]', space=smem, size = 0x4, offset = 0x4, fixed_abs, tag = 'smem constant byte address 0x4 - core index']
  #allocation1 [shape = 'u32[144,128]{1,0:T(1,128)}', space=vmem, size = 0x12000, scoped, tag = 'internal scratch']
  %s0 = inlined_call_operand.hbm [shape: f32[32,128], index: 0, kind: input, shape index: {}]
  %s1 = inlined_call_operand.hbm [shape: f32[128,1024], index: 1, kind: input, shape index: {}]
  %s2 = inlined_call_operand.vmem [shape: f32[32,1024], index: 2, kind: output, shape index: {}]
  %s3 = sld [smem:[#allocation0]]
  $region68: #{_lambda_.1} parent=0
    _
  %s5 = ssub.s32 1, %s3
  %s6 = scalar_select 0, %s5, %s3
  $region1: #{_lambda_.1} parent=0
    #allocation2 [shape = 'u8[16384]{0}', space=vmem, size = 0x4000, scoped, tag = 'input window, operand 0, single buffered']
    #allocation3 [shape = 's32[2]{0}', space=sflag, size = 0x8, scoped, tag = 'scoped memory for _lambda_.1']
    #allocation4 [shape = 'u8[262144]{0}', space=vmem, size = 0x40000, scoped, tag = 'input window, operand 1']
    #allocation5 [shape = 's32[2]{0}', space=sflag, size = 0x8, scoped, tag = 'scoped memory for _lambda_.1']
    #allocation6 [shape = 'u8[65536]{0}', space=vmem, size = 0x10000, scoped, tag = 'output window, operand 0']
    %7 = vsyncpa [#allocation3], 0
    %8 = vsyncpa [#allocation5], 0
    %s9 = scalar_lea.sflag [#allocation5], 1
    %10 = vsyncpa %s9, 0
    loop: start=0, step=1, limit=6
    $region2: #{_lambda_.1} parent=1 // loop_pre_header
      _
    $region3: #{_lambda_.1} parent=1 // loop_header
      %s12 = sphi 0, %s16
      %p13 = scmp.ge.s32.totalorder %s12, 6
      %s20 = sphi 0, %s20
      %s22 = sphi 0, %s20
      %s23 = sphi 0, %s22
      %s37 = sphi 0, %s23
      %s43 = sphi 0, %s45
      %s46 = sphi 0, %s43
      %s47 = sphi 0, %s46
      %s63 = sphi 0, %s47
      %s69 = sphi 0, %s71
      %s72 = sphi 0, %s69
      %s73 = sphi 0, %s72
      %s89 = sphi 0, %s73
    $region4: #{_lambda_.1} parent=1 // loop_header_branch
      %15 = sbr.rel (%p13) target = $region8
    $region5: #{_lambda_.1} parent=1 // loop_body
      %s17 = ssub.s32 %s12, 1
      %s18 = ssub.s32 %s12, 2
      %s19 = sadd.s32 %s12, 1
      %s21 = sadd.s32 %s20, 1
      %p24 = scmp.eq.s32.totalorder %s12, 3
      %p25 = scmp.ne.s32.totalorder %s20, %s22
      %p26 = scmp.eq.s32.totalorder %s12, 0
      %p27 = por %p25, %p26
      %p28 = scmp.ne.s32.totalorder %s20, %s22
      %p29 = scmp.eq.s32.totalorder %s17, 3
      %p30 = por %p28, %p29
      %p31 = scmp.ne.s32.totalorder %s22, %s23
      %p32 = scmp.eq.s32.totalorder %s17, 0
      %p33 = por %p31, %p32
      %p34 = scmp.ne.s32.totalorder %s22, %s23
      %p35 = scmp.eq.s32.totalorder %s18, 3
      %p36 = por %p34, %p35
      %p38 = scmp.ne.s32.totalorder %s23, %s37
      %p39 = scmp.eq.s32.totalorder %s18, 0
      %p40 = por %p38, %p39
      %s41 = ssub.s32 %s12, %s19
      %p42 = scmp.eq.s32.totalorder %s41, 0
      %s44 = sadd.s32 %s43, 1
      %s45 = scalar_select %p42, %s43, %s44
      %p48 = pneg %p42
      %p49 = scmp.eq.s32.totalorder %s12, 3
      %p50 = por %p48, %p49
      %p51 = scmp.ne.s32.totalorder %s43, %s46
      %p52 = scmp.eq.s32.totalorder %s12, 0
      %p53 = por %p51, %p52
      %p54 = scmp.ne.s32.totalorder %s43, %s46
      %p55 = scmp.eq.s32.totalorder %s17, 3
      %p56 = por %p54, %p55
      %p57 = scmp.ne.s32.totalorder %s46, %s47
      %p58 = scmp.eq.s32.totalorder %s17, 0
      %p59 = por %p57, %p58
      %p60 = scmp.ne.s32.totalorder %s46, %s47
      %p61 = scmp.eq.s32.totalorder %s18, 3
      %p62 = por %p60, %p61
      %p64 = scmp.ne.s32.totalorder %s47, %s63
      %p65 = scmp.eq.s32.totalorder %s18, 0
      %p66 = por %p64, %p65
      %s67 = ssub.s32 %s12, %s19
      %p68 = scmp.eq.s32.totalorder %s67, 0
      %s70 = sadd.s32 %s69, 1
      %s71 = scalar_select %p68, %s69, %s70
      %p74 = pneg %p68
      %p75 = scmp.eq.s32.totalorder %s12, 3
      %p76 = por %p74, %p75
      %p77 = scmp.ne.s32.totalorder %s69, %s72
      %p78 = scmp.eq.s32.totalorder %s12, 0
      %p79 = por %p77, %p78
      %p80 = scmp.ne.s32.totalorder %s69, %s72
      %p81 = scmp.eq.s32.totalorder %s17, 3
      %p82 = por %p80, %p81
      %p83 = scmp.ne.s32.totalorder %s72, %s73
      %p84 = scmp.eq.s32.totalorder %s17, 0
      %p85 = por %p83, %p84
      %p86 = scmp.ne.s32.totalorder %s72, %s73
      %p87 = scmp.eq.s32.totalorder %s18, 3
      %p88 = por %p86, %p87
      %p90 = scmp.ne.s32.totalorder %s73, %s89
      %p91 = scmp.eq.s32.totalorder %s18, 0
      %p92 = por %p90, %p91
      %p93 = scmp.le.s32.totalorder 1, %s12
      %p94 = scmp.lt.s32.totalorder %s12, 5
      %p95 = pnand %p93, %p94
      %p96 = pneg %p95
      // Predicated region
      $region9: #{_lambda_.1} parent=5 // pred_check
        _
      $region10: #{_lambda_.1} parent=5 // pred_check_branch
        %98 = sbr.rel (%p95) target = $region12
      $region11: #{_lambda_.1} parent=5 // pred_region
        %s99 = ssub.s32 %s12, 1
        // Predicated region
        $region13: #{_lambda_.1} parent=11 // pred_check
          %p100 = pneg %p33
        $region14: #{_lambda_.1} parent=11 // pred_check_branch
          %102 = sbr.rel (%p100) target = $region16
        $region15: #{_lambda_.1} parent=11 // pred_region
          %s104 = ssub.s32 512, 512
          %105 = vsyncadd [#allocation3], %s104
          %s106 = sshll.u32 [#allocation2], 4
          %s107 = int_to_ptr.vmem [resolvable:$true] %s106
          %112 = dma.hbm_to_vmem [thread:$0]  %s0, 512, %s107, [#allocation3], 128, 128, 8
        $region16: #{_lambda_.1} parent=11 // pred_fallthru
          _
      $region12: #{_lambda_.1} parent=5 // pred_fallthru
        _
      %p113 = scmp.lt.s32.totalorder %s12, 4
      // Predicated region
      $region17: #{_lambda_.1} parent=5 // pred_check
        %p114 = pneg %p113
      $region18: #{_lambda_.1} parent=5 // pred_check_branch
        %116 = sbr.rel (%p114) target = $region20
      $region19: #{_lambda_.1} parent=5 // pred_region
        // Predicated region
        $region21: #{_lambda_.1} parent=19 // pred_check
          %p117 = pneg %p53
        $region22: #{_lambda_.1} parent=19 // pred_check_branch
          %119 = sbr.rel (%p117) target = $region24
        $region23: #{_lambda_.1} parent=19 // pred_region
          %s120 = sand.u32 %s43, 1
          %s121 = scalar_lea.sflag [#allocation5], %s120
          %s122 = sand.u32 %s43, 1
          %s123 = smul.addr %s122, 256
          %s124 = scalar_lea.vmem [#allocation4], %s123
          %s125 = smul.u32 2, %s12
          %s127 = ssub.s32 4096, 4096
          %128 = vsyncadd %s121, %s127
          %s129 = smul.addr %s125, 128
          %s130 = scalar_lea.hbm %s1, %s129
          %s131 = sshll.u32 %s124, 4
          %s132 = int_to_ptr.vmem [resolvable:$true] %s131
          %137 = dma.hbm_to_vmem [thread:$0]  %s130, 4096, %s132, %s121, 1024, 256, 16
        $region24: #{_lambda_.1} parent=19 // pred_fallthru
          _
      $region20: #{_lambda_.1} parent=5 // pred_fallthru
        _
      %p138 = scmp.le.s32.totalorder 1, %s12
      %p139 = scmp.lt.s32.totalorder %s12, 5
      %p140 = pnand %p138, %p139
      %p141 = pneg %p140
      // Predicated region
      $region25: #{_lambda_.1} parent=5 // pred_check
        _
      $region26: #{_lambda_.1} parent=5 // pred_check_branch
        %143 = sbr.rel (%p140) target = $region28
      $region27: #{_lambda_.1} parent=5 // pred_region
        %s144 = ssub.s32 %s12, 1
        // Predicated region
        $region29: #{_lambda_.1} parent=27 // pred_check
          %p145 = pneg %p33
        $region30: #{_lambda_.1} parent=27 // pred_check_branch
          %147 = sbr.rel (%p145) target = $region32
        $region31: #{_lambda_.1} parent=27 // pred_region
          %148 = dma.done [#allocation3], 512
        $region32: #{_lambda_.1} parent=27 // pred_fallthru
          _
        %s149 = sand.u32 %s46, 1
        %s150 = scalar_lea.sflag [#allocation5], %s149
        %s151 = sand.u32 %s46, 1
        %s152 = smul.addr %s151, 256
        %s153 = scalar_lea.vmem [#allocation4], %s152
        // Predicated region
        $region33: #{_lambda_.1} parent=27 // pred_check
          %p154 = pneg %p59
        $region34: #{_lambda_.1} parent=27 // pred_check_branch
          %156 = sbr.rel (%p154) target = $region36
        $region35: #{_lambda_.1} parent=27 // pred_region
          %157 = dma.done %s150, 4096
        $region36: #{_lambda_.1} parent=27 // pred_fallthru
          _
        %p158 = pneg %p33
        %p159 = pneg %p30
        %s160 = sand.u32 %s46, 1
        %s161 = scalar_lea.sflag [#allocation5], %s160
        %s162 = sand.u32 %s46, 1
        %s163 = smul.addr %s162, 256
        %s164 = scalar_lea.vmem [#allocation4], %s163
        %p165 = pneg %p59
        %p166 = pneg %p56
        %p167 = pneg %p85
        %p168 = pneg %p82
        %s169 = sand.u32 %s72, 1
        %s170 = sand.u32 %s72, 1
        %s171 = smul.addr %s170, 64
        %s172 = scalar_lea.vmem [#allocation6], %s171
        %s173 = smul.u32 2, %s17
        %s174 = smul.u32 2, %s17
        %v175 = vld [vmem:[#allocation2] sm:$0xff]
        %v176 = vld [vmem:[#allocation2 + $0x8] sm:$0xff]
        %v177 = vld [vmem:[#allocation2 + $0x10] sm:$0xff]
        %v178 = vld [vmem:[#allocation2 + $0x18] sm:$0xff]
        %v179 = vld [vmem:[%s153] sm:$0xff]
        %v180 = vld [vmem:[%s153 + $0x8] sm:$0xff]
        %v181 = vld [vmem:[%s153 + $0x10] sm:$0xff]
        %v182 = vld [vmem:[%s153 + $0x18] sm:$0xff]
        %v183 = vld [vmem:[%s153 + $0x20] sm:$0xff]
        %v184 = vld [vmem:[%s153 + $0x28] sm:$0xff]
        %v185 = vld [vmem:[%s153 + $0x30] sm:$0xff]
        %v186 = vld [vmem:[%s153 + $0x38] sm:$0xff]
        %v187 = vld [vmem:[%s153 + $0x40] sm:$0xff]
        %v188 = vld [vmem:[%s153 + $0x48] sm:$0xff]
        %v189 = vld [vmem:[%s153 + $0x50] sm:$0xff]
        %v190 = vld [vmem:[%s153 + $0x58] sm:$0xff]
        %v191 = vld [vmem:[%s153 + $0x60] sm:$0xff]
        %v192 = vld [vmem:[%s153 + $0x68] sm:$0xff]
        %v193 = vld [vmem:[%s153 + $0x70] sm:$0xff]
        %v194 = vld [vmem:[%s153 + $0x78] sm:$0xff]
        %v195 = vld [vmem:[%s153 + $0x80] sm:$0xff]
        %v196 = vld [vmem:[%s153 + $0x88] sm:$0xff]
        %v197 = vld [vmem:[%s153 + $0x90] sm:$0xff]
        %v198 = vld [vmem:[%s153 + $0x98] sm:$0xff]
        %v199 = vld [vmem:[%s153 + $0xa0] sm:$0xff]
        %v200 = vld [vmem:[%s153 + $0xa8] sm:$0xff]
        %v201 = vld [vmem:[%s153 + $0xb0] sm:$0xff]
        %v202 = vld [vmem:[%s153 + $0xb8] sm:$0xff]
        %v203 = vld [vmem:[%s153 + $0xc0] sm:$0xff]
        %v204 = vld [vmem:[%s153 + $0xc8] sm:$0xff]
        %v205 = vld [vmem:[%s153 + $0xd0] sm:$0xff]
        %v206 = vld [vmem:[%s153 + $0xd8] sm:$0xff]
        %v207 = vld [vmem:[%s153 + $0xe0] sm:$0xff]
        %v208 = vld [vmem:[%s153 + $0xe8] sm:$0xff]
        %v209 = vld [vmem:[%s153 + $0xf0] sm:$0xff]
        %v210 = vld [vmem:[%s153 + $0xf8] sm:$0xff]
        %211 = vmatprep.subr.mxu0 %v180
        %212 = vmatpush1.msra.mxu0 %v179
        %213 = vmatprep.subr.mxu0 %v182
        %214 = vmatpush1.msra.mxu0 %v181
        %215 = vmatprep.subr.mxu0 %v184
        %216 = vmatpush1.msra.mxu0 %v183
        %217 = vmatprep.subr.mxu0 %v186
        %218 = vmatpush1.msra.mxu0 %v185
        %219 = vmatprep.subr.mxu0 %v188
        %220 = vmatpush1.msra.mxu0 %v187
        %221 = vmatprep.subr.mxu0 %v190
        %222 = vmatpush1.msra.mxu0 %v189
        %223 = vmatprep.subr.mxu0 %v192
        %224 = vmatpush1.msra.mxu0 %v191
        %225 = vmatprep.subr.mxu0 %v194
        %226 = vmatpush1.msra.mxu0 %v193
        %227 = vmatprep.subr.mxu0 %v196
        %228 = vmatpush1.msra.mxu0 %v195
        %229 = vmatprep.subr.mxu0 %v198
        %230 = vmatpush1.msra.mxu0 %v197
        %231 = vmatprep.subr.mxu0 %v200
        %232 = vmatpush1.msra.mxu0 %v199
        %233 = vmatprep.subr.mxu0 %v202
        %234 = vmatpush1.msra.mxu0 %v201
        %235 = vmatprep.subr.mxu0 %v204
        %236 = vmatpush1.msra.mxu0 %v203
        %237 = vmatprep.subr.mxu0 %v206
        %238 = vmatpush1.msra.mxu0 %v205
        %239 = vmatprep.subr.mxu0 %v208
        %240 = vmatpush1.msra.mxu0 %v207
        %241 = vmatprep.subr.mxu0 %v210
        %242 = vmatpush1.msra.mxu0 %v209
        %243 = vmatprep.subr.mxu0 0.0
        %244 = vmatpush1.msra.mxu0 0.0
        %245 = vmatprep.subr.mxu0 0.0
        %246 = vmatpush1.msra.mxu0 0.0
        %247 = vmatprep.subr.mxu0 0.0
        %248 = vmatpush1.msra.mxu0 0.0
        %249 = vmatprep.subr.mxu0 0.0
        %250 = vmatpush1.msra.mxu0 0.0
        %251 = vmatprep.subr.mxu0 0.0
        %252 = vmatpush1.msra.mxu0 0.0
        %253 = vmatprep.subr.mxu0 0.0
        %254 = vmatpush1.msra.mxu0 0.0
        %255 = vmatprep.subr.mxu0 0.0
        %256 = vmatpush1.msra.mxu0 0.0
        %257 = vmatprep.subr.mxu0 0.0
        %258 = vmatpush1.msra.mxu0 0.0
        %259 = vmatprep.subr.mxu0 0.0
        %260 = vmatpush1.msra.mxu0 0.0
        %261 = vmatprep.subr.mxu0 0.0
        %262 = vmatpush1.msra.mxu0 0.0
        %263 = vmatprep.subr.mxu0 0.0
        %264 = vmatpush1.msra.mxu0 0.0
        %265 = vmatprep.subr.mxu0 0.0
        %266 = vmatpush1.msra.mxu0 0.0
        %267 = vmatprep.subr.mxu0 0.0
        %268 = vmatpush1.msra.mxu0 0.0
        %269 = vmatprep.subr.mxu0 0.0
        %270 = vmatpush1.msra.mxu0 0.0
        %271 = vmatprep.subr.mxu0 0.0
        %272 = vmatpush1.msra.mxu0 0.0
        %273 = vmatprep.subr.mxu0 0.0
        %274 = vmatpush1.msra.mxu0 0.0
        %275 = vmatprep.mubr.f32.mxu0 0.0
        %276 = vmatmul.mubr.f32.gmra.mrb[0].mxu0 %v175
        %v277 = vpop.f32.mrb[0].mxu0
        %v278 = vadd.f32 0.0, %v277
        %v279 = vpop.f32.mrb[0].mxu0
        %v280 = vadd.f32 0.0, %v279
        %281 = vmatprep.mubr.f32.mxu0 0.0
        %282 = vmatmul.mubr.f32.gmra.mrb[0].mxu0 %v176
        %v283 = vpop.f32.mrb[0].mxu0
        %v284 = vadd.f32 0.0, %v283
        %v285 = vpop.f32.mrb[0].mxu0
        %v286 = vadd.f32 0.0, %v285
        %287 = vmatprep.mubr.f32.mxu0 0.0
        %288 = vmatmul.mubr.f32.gmra.mrb[0].mxu0 %v177
        %v289 = vpop.f32.mrb[0].mxu0
        %v290 = vadd.f32 0.0, %v289
        %v291 = vpop.f32.mrb[0].mxu0
        %v292 = vadd.f32 0.0, %v291
        %293 = vmatprep.mubr.f32.mxu0 0.0
        %294 = vmatmul.mubr.f32.gmra.mrb[0].mxu0 %v178
        %v295 = vpop.f32.mrb[0].mxu0
        %v296 = vadd.f32 0.0, %v295
        %v297 = vpop.f32.mrb[0].mxu0
        %v298 = vadd.f32 0.0, %v297
        %299 = vdwg.mxu0
        %300 = vst [vmem:[%s172] sm:$0xff] %v278
        %301 = vst [vmem:[%s172 + $0x8] sm:$0xff] %v280
        %302 = vst [vmem:[%s172 + $0x10] sm:$0xff] %v284
        %303 = vst [vmem:[%s172 + $0x18] sm:$0xff] %v286
        %304 = vst [vmem:[%s172 + $0x20] sm:$0xff] %v290
        %305 = vst [vmem:[%s172 + $0x28] sm:$0xff] %v292
        %306 = vst [vmem:[%s172 + $0x30] sm:$0xff] %v296
        %307 = vst [vmem:[%s172 + $0x38] sm:$0xff] %v298
        %s308 = sand.u32 %s72, 1
        %s309 = sand.u32 %s72, 1
        %s310 = smul.addr %s309, 64
        %s311 = scalar_lea.vmem [#allocation6], %s310
        // Predicated region
        $region37: #{_lambda_.1} parent=27 // pred_check
          %p312 = pneg %p82
        $region38: #{_lambda_.1} parent=27 // pred_check_branch
          %314 = sbr.rel (%p312) target = $region40
        $region39: #{_lambda_.1} parent=27 // pred_region
          %s315 = smul.u32 2, %s17
          %s316 = smul.addr %s315, 8
          %s317 = scalar_lea.vmem %s2, %s316
          // Predicated region
          $region41: #{_lambda_.1} parent=39 // pred_check
            _
          $region42: #{_lambda_.1} parent=39 // pred_check_branch
            %319 = sbr.rel (0) target = $region44
          $region43: #{_lambda_.1} parent=39 // pred_region
            // Predicated region
            $region45: #{_lambda_.1} parent=43 // pred_check
              _
            $region46: #{_lambda_.1} parent=43 // pred_check_branch
              %321 = sbr.rel (0) target = $region48
            $region47: #{_lambda_.1} parent=43 // pred_region
              loop: start=0, step=1, limit=1
              $region49: #{_lambda_.1} parent=47 // loop_pre_header
                _
              $region50: #{_lambda_.1} parent=47 // loop_header
                %s323 = sphi 0, %s327
                %p324 = scmp.ge.s32.totalorder %s323, 1
                %s328 = sphi %s311, %s311
                %s329 = sphi %s317, %s317
              $region51: #{_lambda_.1} parent=47 // loop_header_branch
                %326 = sbr.rel (%p324) target = $region55
              $region52: #{_lambda_.1} parent=47 // loop_body
                %v330 = vld [vmem:[%s328] sm:$0xff]
                %331 = vst [vmem:[%s329] sm:$0xff] %v330
                %v332 = vld [vmem:[%s328 + $0x8] sm:$0xff]
                %333 = vst [vmem:[%s329 + $0x8] sm:$0xff] %v332
                %v334 = vld [vmem:[%s328 + $0x10] sm:$0xff]
                %335 = vst [vmem:[%s329 + $0x40] sm:$0xff] %v334
                %v336 = vld [vmem:[%s328 + $0x18] sm:$0xff]
                %337 = vst [vmem:[%s329 + $0x48] sm:$0xff] %v336
                %v338 = vld [vmem:[%s328 + $0x20] sm:$0xff]
                %339 = vst [vmem:[%s329 + $0x80] sm:$0xff] %v338
                %v340 = vld [vmem:[%s328 + $0x28] sm:$0xff]
                %341 = vst [vmem:[%s329 + $0x88] sm:$0xff] %v340
                %v342 = vld [vmem:[%s328 + $0x30] sm:$0xff]
                %343 = vst [vmem:[%s329 + $0xc0] sm:$0xff] %v342
                %v344 = vld [vmem:[%s328 + $0x38] sm:$0xff]
                %345 = vst [vmem:[%s329 + $0xc8] sm:$0xff] %v344
              $region53: #{_lambda_.1} parent=47 // loop_footer
                %s327 = sadd.s32 1, %s323
              $region54: #{_lambda_.1} parent=47 // loop_footer_branch
                %322 = sbr.rel target = $region50
              $region55: #{_lambda_.1} parent=47 // loop_exit
                _
            $region48: #{_lambda_.1} parent=43 // pred_fallthru
              _
            // Predicated region
            $region56: #{_lambda_.1} parent=43 // pred_check
              _
            $region57: #{_lambda_.1} parent=43 // pred_check_branch
              %347 = sbr.rel target = $region59
            $region58: #{_lambda_.1} parent=43 // pred_region
              _
            $region59: #{_lambda_.1} parent=43 // pred_fallthru
              _
          $region44: #{_lambda_.1} parent=39 // pred_fallthru
            _
          %348 = vnop
        $region40: #{_lambda_.1} parent=27 // pred_fallthru
          _
      $region28: #{_lambda_.1} parent=5 // pred_fallthru
        _
      %p349 = scmp.le.s32.totalorder 2, %s12
      // Predicated region
      $region60: #{_lambda_.1} parent=5 // pred_check
        %p350 = pneg %p349
      $region61: #{_lambda_.1} parent=5 // pred_check_branch
        %352 = sbr.rel (%p350) target = $region63
      $region62: #{_lambda_.1} parent=5 // pred_region
        %s353 = ssub.s32 %s12, 2
        // Predicated region
        $region64: #{_lambda_.1} parent=62 // pred_check
          %p354 = pneg %p88
        $region65: #{_lambda_.1} parent=62 // pred_check_branch
          %356 = sbr.rel (%p354) target = $region67
        $region66: #{_lambda_.1} parent=62 // pred_region
          %s357 = sand.u32 %s73, 1
          %s358 = sand.u32 %s73, 1
          %s359 = smul.addr %s358, 64
          %s360 = scalar_lea.vmem [#allocation6], %s359
        $region67: #{_lambda_.1} parent=62 // pred_fallthru
          _
      $region63: #{_lambda_.1} parent=5 // pred_fallthru
        _
    $region6: #{_lambda_.1} parent=1 // loop_footer
      %s16 = sadd.s32 1, %s12
    $region7: #{_lambda_.1} parent=1 // loop_footer_branch
      %11 = sbr.rel target = $region3
    $region8: #{_lambda_.1} parent=1 // loop_exit
      _
    %361 = vsyncpa [#allocation3], 1
    %s362 = scalar_lea.sflag [#allocation3], 1
    %363 = vsyncpa %s362, 1
    %364 = vsyncpa [#allocation5], 1
    %s365 = scalar_lea.sflag [#allocation5], 1
    %366 = vsyncpa %s365, 1

</llo_original>
